<compile_context>
chip_gen: v5e
topology: v5e:2x2
jax: 0.10.0
libtpu: 0.0.40
codegen_flags: <defaults>
</compile_context>

<pallas_src>
import math

import jax
import jax.numpy as jnp
from jax.experimental import pallas as pl
from jax.experimental.pallas import tpu as pltpu

_LANE = 128
_NEG_INF = -1e30


# -----------------------------------------------------------------------------
# Fused kernel: both ST-GCN surrogate backbones + MTGEA attention head.
# All operands are tiny (KBs), so everything lives in VMEM with no grid.
# -----------------------------------------------------------------------------
def _mtgea_fused_kernel(x_ref, ak_ref, sel_ref, w1_ref, b1_ref,
                        wbig_ref, bbig_ref, wfa_ref, out_ref):
    # 1) Spatial graph conv, both streams fused, lane-dense 128 contraction.
    #    x: (2*N*C, T*V) rows, A_kron = kron(I_T, A): (T*V, T*V).
    xa = jnp.maximum(
        jnp.dot(x_ref[...], ak_ref[...], preferred_element_type=jnp.float32),
        0.0)                                                     # (2NC, TV)

    # 2) Global avg pool over (T,V) + per-sample channel gather + 1st MLP
    #    layer folded into one selector matmul (1/(T*V) folded into sel).
    rsum = jnp.sum(xa, axis=-1, keepdims=True)                   # (2NC, 1)
    feat = jnp.maximum(
        jnp.dot(sel_ref[...], rsum * w1_ref[...],
                preferred_element_type=jnp.float32) + b1_ref[...],
        0.0)                                                     # (N, 2H)

    # 3) One matmul producing [rad_k | rad_v | kin_q*scale | rad@wf_rad+bf],
    #    each in its own 128-lane, zero-padded segment.
    proj = jnp.dot(feat, wbig_ref[...],
                   preferred_element_type=jnp.float32) + bbig_ref[...]  # (N,512)
    rad_k = proj[:, 0 * _LANE:1 * _LANE]
    rad_v = proj[:, 1 * _LANE:2 * _LANE]
    kin_q = proj[:, 2 * _LANE:3 * _LANE]          # scale folded on the host
    logit0 = proj[:, 3 * _LANE:4 * _LANE]         # rad-part of the classifier

    # 4) Batch attention (N x N): padded lanes of rad_k / kin_q are zero, so
    #    the 128-wide contraction is exact.
    scores = jax.lax.dot_general(kin_q, rad_k, (((1,), (1,)), ((), ())),
                                 preferred_element_type=jnp.float32)   # (N, N)
    scores = scores - jnp.max(scores, axis=-1, keepdims=True)
    es = jnp.exp(scores)
    att = es * pl.reciprocal(jnp.sum(es, axis=-1, keepdims=True), approx=True)
    ctx = jnp.dot(att, rad_v, preferred_element_type=jnp.float32)      # (N,128)
    att_out = pl.reciprocal(1.0 + jnp.exp(-ctx), approx=True)          # sigmoid

    # 5) Final classifier + softmax.  Padded class lanes carry a -1e30 bias
    #    (baked into bbig) and zero wfa rows/cols, so no masking is needed.
    logits = logit0 + jnp.dot(att_out, wfa_ref[...],
                              preferred_element_type=jnp.float32)      # (N,128)
    logits = logits - jnp.max(logits, axis=-1, keepdims=True)
    el = jnp.exp(logits)
    out_ref[...] = el / jnp.sum(el, axis=-1, keepdims=True)   # exact divide


# -----------------------------------------------------------------------------
# Host-side constant packing (built ONCE per model / batch size and cached).
# -----------------------------------------------------------------------------
def pack_constants(A, p_rad, p_kin, head, N, C, T, V):
    H = p_rad["w1"].shape[1]
    K = p_rad["wc"].shape[1]
    OC = head["bf"].shape[1]
    assert K <= _LANE and OC <= _LANE, "segment packing assumes K, OC <= 128"

    # Lane-dense graph conv operator.
    a_kron = jnp.kron(jnp.eye(T, dtype=jnp.float32), A)              # (TV, TV)

    # Pooling selector (1/(T*V) folded in) over rows ordered (n, stream, c).
    sel = jnp.repeat(jnp.eye(N, dtype=jnp.float32), 2 * C, axis=1) / (T * V)

    # Block-diagonal first MLP layer, tiled so rsum * w1_tiled needs no gather.
    w1bd = jnp.zeros((2 * C, 2 * H), jnp.float32)
    w1bd = w1bd.at[:C, :H].set(p_rad["w1"]).at[C:, H:].set(p_kin["w1"])
    w1_tiled = jnp.tile(w1bd, (N, 1))                                 # (2NC, 2H)
    b1 = jnp.concatenate([p_rad["b1"], p_kin["b1"]], axis=1)          # (1, 2H)

    # Pre-multiplied second-layer + head-projection slab.
    scale = 1.0 / math.sqrt(K)                                        # 1/sqrt(d_k)
    wbig = jnp.zeros((2 * H, 4 * _LANE), jnp.float32)
    wbig = wbig.at[:H, 0:K].set(p_rad["wc"] @ head["wk"])
    wbig = wbig.at[:H, _LANE:_LANE + K].set(p_rad["wc"] @ head["wv"])
    wbig = wbig.at[H:, 2 * _LANE:2 * _LANE + K].set(
        p_kin["wc"] @ head["wq"] * scale)
    wbig = wbig.at[:H, 3 * _LANE:3 * _LANE + OC].set(
        p_rad["wc"] @ head["wf_rad"])

    bbig = jnp.zeros((1, 4 * _LANE), jnp.float32)
    bbig = bbig.at[:, 0:K].set(p_rad["bc"] @ head["wk"] + head["bk"])
    bbig = bbig.at[:, _LANE:_LANE + K].set(p_rad["bc"] @ head["wv"] + head["bv"])
    bbig = bbig.at[:, 2 * _LANE:2 * _LANE + K].set(
        (p_kin["bc"] @ head["wq"] + head["bq"]) * scale)
    bbig = bbig.at[:, 3 * _LANE:3 * _LANE + OC].set(
        p_rad["bc"] @ head["wf_rad"] + head["bf"])
    bbig = bbig.at[:, 3 * _LANE + OC:].set(_NEG_INF)   # mask padded classes

    # att_out @ wf_att, zero-padded (rows beyond K are zero so the sigmoid's
    # 0.5 padding lanes contribute nothing; cols beyond OC are zero).
    wfa = jnp.zeros((_LANE, _LANE), jnp.float32)
    wfa = wfa.at[:K, :OC].set(head["wf_att"])

    return dict(a_kron=a_kron, sel=sel, w1=w1_tiled, b1=b1,
                wbig=wbig, bbig=bbig, wfa=wfa, oc=OC)


def mtgea_forward(first, second, packed):
    """first, second: (N, C, T, V) float32 -> (N, output_class) softmax."""
    N, C, T, V = first.shape
    # Rows ordered (n, stream, c) -> both streams share one graph-conv matmul.
    x_cat = jnp.stack(
        [first.reshape(N, C, T * V), second.reshape(N, C, T * V)],
        axis=1).reshape(2 * N * C, T * V)

    vmem = pl.BlockSpec(memory_space=pltpu.MemorySpace.VMEM)
    out = pl.pallas_call(
        _mtgea_fused_kernel,
        out_shape=jax.ShapeDtypeStruct((N, _LANE), jnp.float32),
        in_specs=[vmem] * 8,
        out_specs=vmem,
    )(x_cat, packed["a_kron"], packed["sel"], packed["w1"], packed["b1"],
      packed["wbig"], packed["bbig"], packed["wfa"])
    return out[:, :packed["oc"]]


# -----------------------------------------------------------------------------
# Deterministic parameter construction + pure-JAX reference for validation.
# -----------------------------------------------------------------------------
def make_adjacency(V):
    eye = jnp.eye(V, dtype=jnp.float32)
    a0 = eye + jnp.roll(eye, 1, axis=0) + jnp.roll(eye, -1, axis=0)
    return a0 / jnp.sum(a0, axis=1, keepdims=True)


def init_backbone(key, C, H, K):
    k1, k2, k3, k4 = jax.random.split(key, 4)
    return {
        "w1": jax.random.normal(k1, (C, H), jnp.float32) / math.sqrt(C),
        "b1": 0.1 * jax.random.normal(k2, (1, H), jnp.float32),
        "wc": jax.random.normal(k3, (H, K), jnp.float32) / math.sqrt(H),
        "bc": 0.1 * jax.random.normal(k4, (1, K), jnp.float32),
    }


def init_head(key, K, OC):
    ks = jax.random.split(key, 8)
    wfc = jax.random.normal(ks[6], (2 * K, OC), jnp.float32) / math.sqrt(2 * K)
    return {
        "wk": jax.random.normal(ks[0], (K, K), jnp.float32) / math.sqrt(K),
        "bk": 0.1 * jax.random.normal(ks[1], (1, K), jnp.float32),
        "wv": jax.random.normal(ks[2], (K, K), jnp.float32) / math.sqrt(K),
        "bv": 0.1 * jax.random.normal(ks[3], (1, K), jnp.float32),
        "wq": jax.random.normal(ks[4], (K, K), jnp.float32) / math.sqrt(K),
        "bq": 0.1 * jax.random.normal(ks[5], (1, K), jnp.float32),
        "wf_rad": wfc[:K],
        "wf_att": wfc[K:],
        "bf": 0.1 * jax.random.normal(ks[7], (1, OC), jnp.float32),
    }


def reference_forward(first, second, A, p_rad, p_kin, head):
    def backbone(x, p):
        xa = jnp.maximum(jnp.einsum("nctw,wv->nctv", x, A), 0.0)
        pooled = jnp.mean(xa, axis=(2, 3))                           # (N, C)
        feat = jnp.maximum(pooled @ p["w1"] + p["b1"], 0.0)
        return feat @ p["wc"] + p["bc"]

    rad = backbone(first, p_rad)
    kin = backbone(second, p_kin)
    rad_k = rad @ head["wk"] + head["bk"]
    rad_v = rad @ head["wv"] + head["bv"]
    kin_q = kin @ head["wq"] + head["bq"]
    scores = (kin_q @ rad_k.T) / math.sqrt(kin_q.shape[-1])
    att = jax.nn.softmax(scores, axis=-1)
    att_out = jax.nn.sigmoid(att @ rad_v)
    cat = jnp.concatenate([rad, att_out], axis=1)
    logits = cat @ jnp.concatenate([head["wf_rad"], head["wf_att"]], axis=0) \
        + head["bf"]
    return jax.nn.softmax(logits, axis=-1)


if __name__ == "__main__":
    N, C, T, V = 8, 4, 8, 16          # batch, in_channels, frames, joints (T*V=128)
    H, K, OC = 32, 32, 8              # hidden, num_class, output_class

    root = jax.random.PRNGKey(0)
    k_in1, k_in2, k_rad, k_kin, k_head = jax.random.split(root, 5)

    first = jax.random.normal(k_in1, (N, C, T, V), jnp.float32)
    second = jax.random.normal(k_in2, (N, C, T, V), jnp.float32)

    A = make_adjacency(V)
    p_rad = init_backbone(k_rad, C, H, K)
    p_kin = init_backbone(k_kin, C, H, K)
    head = init_head(k_head, K, OC)

    packed = pack_constants(A, p_rad, p_kin, head, N, C, T, V)   # built once
    out = mtgea_forward(first, second, packed)
    out = jax.block_until_ready(out)

    ref = reference_forward(first, second, A, p_rad, p_kin, head)
    # Tolerance loosened slightly for approximate (EUP) reciprocals used in
    # the attention softmax / sigmoid and for host-side weight pre-folding.
    if not bool(jnp.allclose(out, ref, atol=2e-3, rtol=2e-3)):
        raise AssertionError("Pallas output does not match JAX reference")

    print("KERNEL_OK")
</pallas_src>

<mosaic_0001>
module attributes {stable_mosaic.version = 11 : i64} {
  func.func @_mtgea_fused_kernel(%arg0: memref<64x128xf32, #tpu.memory_space<vmem>>, %arg1: memref<128x128xf32, #tpu.memory_space<vmem>>, %arg2: memref<8x64xf32, #tpu.memory_space<vmem>>, %arg3: memref<64x64xf32, #tpu.memory_space<vmem>>, %arg4: memref<1x64xf32, #tpu.memory_space<vmem>>, %arg5: memref<64x512xf32, #tpu.memory_space<vmem>>, %arg6: memref<1x512xf32, #tpu.memory_space<vmem>>, %arg7: memref<128x128xf32, #tpu.memory_space<vmem>>, %arg8: memref<8x128xf32, #tpu.memory_space<vmem>>) attributes {dimension_semantics = [], scalar_prefetch = 0 : i64, scratch_operands = 0 : i64, tpu.core_type = #tpu.core_type<tc>} {
    %c0 = arith.constant 0 : index
    %c0_0 = arith.constant 0 : index
    %0 = vector.load %arg0[%c0, %c0_0] : memref<64x128xf32, #tpu.memory_space<vmem>>, vector<64x128xf32>
    %c0_1 = arith.constant 0 : index
    %c0_2 = arith.constant 0 : index
    %1 = vector.load %arg1[%c0_1, %c0_2] : memref<128x128xf32, #tpu.memory_space<vmem>>, vector<128x128xf32>
    %cst = arith.constant dense<0.000000e+00> : vector<64x128xf32>
    %2 = tpu.matmul %0, %1, %cst {dimension_numbers = #tpu.dot_dimension_numbers<[1], [0], [0], [1], [0, 0, 1, 1], [], []>} : vector<64x128xf32>, vector<128x128xf32>, vector<64x128xf32> -> vector<64x128xf32>
    %cst_3 = arith.constant 0.000000e+00 : f32
    %3 = vector.broadcast %cst_3 : f32 to vector<64x128xf32>
    %4 = arith.maximumf %2, %3 : vector<64x128xf32>
    %cst_4 = arith.constant dense<0.000000e+00> : vector<64xf32>
    %5 = vector.multi_reduction <add>, %4, %cst_4 [1] : vector<64x128xf32> to vector<64xf32>
    %6 = vector.shape_cast %5 : vector<64xf32> to vector<64x1xf32>
    %c0_5 = arith.constant 0 : index
    %c0_6 = arith.constant 0 : index
    %7 = vector.load %arg2[%c0_5, %c0_6] : memref<8x64xf32, #tpu.memory_space<vmem>>, vector<8x64xf32>
    %c0_7 = arith.constant 0 : index
    %c0_8 = arith.constant 0 : index
    %8 = vector.load %arg3[%c0_7, %c0_8] : memref<64x64xf32, #tpu.memory_space<vmem>>, vector<64x64xf32>
    %9 = vector.broadcast %6 : vector<64x1xf32> to vector<64x64xf32>
    %10 = arith.mulf %9, %8 : vector<64x64xf32>
    %cst_9 = arith.constant dense<0.000000e+00> : vector<8x64xf32>
    %11 = tpu.matmul %7, %10, %cst_9 {dimension_numbers = #tpu.dot_dimension_numbers<[1], [0], [0], [1], [0, 0, 1, 1], [], []>} : vector<8x64xf32>, vector<64x64xf32>, vector<8x64xf32> -> vector<8x64xf32>
    %c0_10 = arith.constant 0 : index
    %c0_11 = arith.constant 0 : index
    %12 = vector.load %arg4[%c0_10, %c0_11] : memref<1x64xf32, #tpu.memory_space<vmem>>, vector<1x64xf32>
    %13 = vector.broadcast %12 : vector<1x64xf32> to vector<8x64xf32>
    %14 = arith.addf %11, %13 : vector<8x64xf32>
    %cst_12 = arith.constant 0.000000e+00 : f32
    %15 = vector.broadcast %cst_12 : f32 to vector<8x64xf32>
    %16 = arith.maximumf %14, %15 : vector<8x64xf32>
    %c0_13 = arith.constant 0 : index
    %c0_14 = arith.constant 0 : index
    %17 = vector.load %arg5[%c0_13, %c0_14] : memref<64x512xf32, #tpu.memory_space<vmem>>, vector<64x512xf32>
    %cst_15 = arith.constant dense<0.000000e+00> : vector<8x512xf32>
    %18 = tpu.matmul %16, %17, %cst_15 {dimension_numbers = #tpu.dot_dimension_numbers<[1], [0], [0], [1], [0, 0, 1, 1], [], []>} : vector<8x64xf32>, vector<64x512xf32>, vector<8x512xf32> -> vector<8x512xf32>
    %c0_16 = arith.constant 0 : index
    %c0_17 = arith.constant 0 : index
    %19 = vector.load %arg6[%c0_16, %c0_17] : memref<1x512xf32, #tpu.memory_space<vmem>>, vector<1x512xf32>
    %20 = vector.broadcast %19 : vector<1x512xf32> to vector<8x512xf32>
    %21 = arith.addf %18, %20 : vector<8x512xf32>
    %22 = vector.extract_strided_slice %21 {offsets = [0, 0], sizes = [8, 128], strides = [1, 1]} : vector<8x512xf32> to vector<8x128xf32>
    %23 = vector.extract_strided_slice %21 {offsets = [0, 128], sizes = [8, 128], strides = [1, 1]} : vector<8x512xf32> to vector<8x128xf32>
    %24 = vector.extract_strided_slice %21 {offsets = [0, 256], sizes = [8, 128], strides = [1, 1]} : vector<8x512xf32> to vector<8x128xf32>
    %25 = vector.extract_strided_slice %21 {offsets = [0, 384], sizes = [8, 128], strides = [1, 1]} : vector<8x512xf32> to vector<8x128xf32>
    %cst_18 = arith.constant dense<0.000000e+00> : vector<8x8xf32>
    %26 = tpu.matmul %24, %22, %cst_18 {dimension_numbers = #tpu.dot_dimension_numbers<[1], [1], [0], [0], [0, 0, 1, 0], [], []>} : vector<8x128xf32>, vector<8x128xf32>, vector<8x8xf32> -> vector<8x8xf32>
    %cst_19 = arith.constant dense<0xFF800000> : vector<8xf32>
    %27 = vector.multi_reduction <maximumf>, %26, %cst_19 [1] : vector<8x8xf32> to vector<8xf32>
    %28 = vector.shape_cast %27 : vector<8xf32> to vector<8x1xf32>
    %29 = vector.broadcast %28 : vector<8x1xf32> to vector<8x8xf32>
    %30 = arith.subf %26, %29 : vector<8x8xf32>
    %31 = math.exp %30 : vector<8x8xf32>
    %cst_20 = arith.constant dense<0.000000e+00> : vector<8xf32>
    %32 = vector.multi_reduction <add>, %31, %cst_20 [1] : vector<8x8xf32> to vector<8xf32>
    %33 = vector.shape_cast %32 : vector<8xf32> to vector<8x1xf32>
    %34 = tpu.reciprocal %33 {approx = true} : vector<8x1xf32> -> vector<8x1xf32>
    %35 = vector.broadcast %34 : vector<8x1xf32> to vector<8x8xf32>
    %36 = arith.mulf %31, %35 : vector<8x8xf32>
    %cst_21 = arith.constant dense<0.000000e+00> : vector<8x128xf32>
    %37 = tpu.matmul %36, %23, %cst_21 {dimension_numbers = #tpu.dot_dimension_numbers<[1], [0], [0], [1], [0, 0, 1, 1], [], []>} : vector<8x8xf32>, vector<8x128xf32>, vector<8x128xf32> -> vector<8x128xf32>
    %cst_22 = arith.constant 0.000000e+00 : f32
    %38 = vector.broadcast %cst_22 : f32 to vector<8x128xf32>
    %39 = arith.subf %38, %37 : vector<8x128xf32>
    %40 = math.exp %39 : vector<8x128xf32>
    %cst_23 = arith.constant 1.000000e+00 : f32
    %41 = vector.broadcast %cst_23 : f32 to vector<8x128xf32>
    %42 = arith.addf %41, %40 : vector<8x128xf32>
    %43 = tpu.reciprocal %42 {approx = true} : vector<8x128xf32> -> vector<8x128xf32>
    %c0_24 = arith.constant 0 : index
    %c0_25 = arith.constant 0 : index
    %44 = vector.load %arg7[%c0_24, %c0_25] : memref<128x128xf32, #tpu.memory_space<vmem>>, vector<128x128xf32>
    %cst_26 = arith.constant dense<0.000000e+00> : vector<8x128xf32>
    %45 = tpu.matmul %43, %44, %cst_26 {dimension_numbers = #tpu.dot_dimension_numbers<[1], [0], [0], [1], [0, 0, 1, 1], [], []>} : vector<8x128xf32>, vector<128x128xf32>, vector<8x128xf32> -> vector<8x128xf32>
    %46 = arith.addf %25, %45 : vector<8x128xf32>
    %cst_27 = arith.constant dense<0xFF800000> : vector<8xf32>
    %47 = vector.multi_reduction <maximumf>, %46, %cst_27 [1] : vector<8x128xf32> to vector<8xf32>
    %48 = vector.shape_cast %47 : vector<8xf32> to vector<8x1xf32>
    %49 = vector.broadcast %48 : vector<8x1xf32> to vector<8x128xf32>
    %50 = arith.subf %46, %49 : vector<8x128xf32>
    %51 = math.exp %50 : vector<8x128xf32>
    %cst_28 = arith.constant dense<0.000000e+00> : vector<8xf32>
    %52 = vector.multi_reduction <add>, %51, %cst_28 [1] : vector<8x128xf32> to vector<8xf32>
    %53 = vector.shape_cast %52 : vector<8xf32> to vector<8x1xf32>
    %54 = vector.broadcast %53 : vector<8x1xf32> to vector<8x128xf32>
    %55 = arith.divf %51, %54 : vector<8x128xf32>
    %c0_29 = arith.constant 0 : index
    %c0_30 = arith.constant 0 : index
    %56 = vector.load %arg8[%c0_29, %c0_30] : memref<8x128xf32, #tpu.memory_space<vmem>>, vector<8x128xf32>
    tpu.vector_store %arg8[%c0_29, %c0_30], %55 {strides = array<i32>} : memref<8x128xf32, #tpu.memory_space<vmem>>, vector<8x128xf32>,
    return
  }
}

</mosaic_0001>

<llo_original>
// kernel: tpu_custom_call.1
$region0: #{tpu_custom_call.1}
  #allocation0 [shape = 'u32[]', space=smem, size = 0x4, offset = 0x4, fixed_abs, tag = 'smem constant byte address 0x4 - core index']
  #allocation1 [shape = 'u32[72,128]{1,0:T(1,128)}', space=vmem, size = 0x9000, scoped, tag = 'internal scratch']
  %s0 = inlined_call_operand.hbm [shape: f32[64,128], index: 0, kind: input, shape index: {}]
  %s1 = inlined_call_operand.hbm [shape: f32[128,128], index: 1, kind: input, shape index: {}]
  %s2 = inlined_call_operand.hbm [shape: f32[8,64], index: 2, kind: input, shape index: {}]
  %s3 = inlined_call_operand.hbm [shape: f32[64,64], index: 3, kind: input, shape index: {}]
  %s4 = inlined_call_operand.vmem [shape: f32[1,64], index: 4, kind: input, shape index: {}]
  %s5 = inlined_call_operand.hbm [shape: f32[64,512], index: 5, kind: input, shape index: {}]
  %s6 = inlined_call_operand.vmem [shape: f32[1,512], index: 6, kind: input, shape index: {}]
  %s7 = inlined_call_operand.hbm [shape: f32[128,128], index: 7, kind: input, shape index: {}]
  %s8 = inlined_call_operand.hbm [shape: f32[8,128], index: 8, kind: output, shape index: {}]
  %s9 = sld [smem:[#allocation0]]
  $region66: #{tpu_custom_call.1} parent=0
    _
  %s11 = ssub.s32 1, %s9
  %s12 = scalar_select 0, %s11, %s9
  $region1: #{tpu_custom_call.1} parent=0
    #allocation2 [shape = 'u8[32768]{0}', space=vmem, size = 0x8000, scoped, tag = 'input window, operand 0, single buffered']
    #allocation3 [shape = 's32[1]{0}', space=sflag, size = 0x4, scoped, tag = 'scoped memory for tpu_custom_call.1']
    #allocation4 [shape = 's32[1]{0}', space=sflag, size = 0x4, scoped, tag = 'scoped memory for tpu_custom_call.1']
    #allocation5 [shape = 'u8[65536]{0}', space=vmem, size = 0x10000, scoped, tag = 'input window, operand 1, single buffered']
    #allocation6 [shape = 's32[1]{0}', space=sflag, size = 0x4, scoped, tag = 'scoped memory for tpu_custom_call.1']
    #allocation7 [shape = 'u8[4096]{0}', space=vmem, size = 0x1000, scoped, tag = 'input window, operand 2, single buffered']
    #allocation8 [shape = 'u8[32768]{0}', space=vmem, size = 0x8000, scoped, tag = 'input window, operand 3, single buffered']
    #allocation9 [shape = 's32[1]{0}', space=sflag, size = 0x4, scoped, tag = 'scoped memory for tpu_custom_call.1']
    #allocation10 [shape = 'u8[131072]{0}', space=vmem, size = 0x20000, scoped, tag = 'input window, operand 5, single buffered']
    #allocation11 [shape = 'u8[65536]{0}', space=vmem, size = 0x10000, scoped, tag = 'input window, operand 7, single buffered']
    #allocation12 [shape = 's32[1]{0}', space=sflag, size = 0x4, scoped, tag = 'scoped memory for tpu_custom_call.1']
    #allocation13 [shape = 'u8[4096]{0}', space=vmem, size = 0x1000, scoped, tag = 'output window, operand 0, single buffered']
    %13 = vsyncpa [#allocation3], 0
    %14 = vsyncpa [#allocation6], 0
    %15 = vsyncpa [#allocation9], 0
    %16 = vsyncpa [#allocation12], 0
    %17 = vsyncpa [#allocation4], 0
    // Predicated region
    $region2: #{tpu_custom_call.1} parent=1 // pred_check
      _
    $region3: #{tpu_custom_call.1} parent=1 // pred_check_branch
      %19 = sbr.rel (0) target = $region5
    $region4: #{tpu_custom_call.1} parent=1 // pred_region
      %21 = vsyncadd [#allocation3], 0
      %s22 = sshll.u32 %s0, 4
      %s23 = int_to_ptr.hbm [resolvable:$true] %s22
      %s24 = sshll.u32 [#allocation2], 4
      %s25 = int_to_ptr.vmem [resolvable:$true] %s24
      %30 = dma.hbm_to_vmem [thread:$0]  %s23, 1024, %s25, [#allocation3], 128, 128, 8
    $region5: #{tpu_custom_call.1} parent=1 // pred_fallthru
      _
    // Predicated region
    $region6: #{tpu_custom_call.1} parent=1 // pred_check
      _
    $region7: #{tpu_custom_call.1} parent=1 // pred_check_branch
      %32 = sbr.rel (0) target = $region9
    $region8: #{tpu_custom_call.1} parent=1 // pred_region
      %34 = vsyncadd [#allocation6], 0
      %s35 = sshll.u32 %s1, 4
      %s36 = int_to_ptr.hbm [resolvable:$true] %s35
      %s37 = sshll.u32 [#allocation5], 4
      %s38 = int_to_ptr.vmem [resolvable:$true] %s37
      %43 = dma.hbm_to_vmem [thread:$0]  %s36, 2048, %s38, [#allocation6], 128, 128, 8
    $region9: #{tpu_custom_call.1} parent=1 // pred_fallthru
      _
    // Predicated region
    $region10: #{tpu_custom_call.1} parent=1 // pred_check
      _
    $region11: #{tpu_custom_call.1} parent=1 // pred_check_branch
      %45 = sbr.rel (0) target = $region13
    $region12: #{tpu_custom_call.1} parent=1 // pred_region
      %47 = vsyncadd [#allocation6], 0
      %s49 = sshll.u32 %s2, 4
      %s50 = int_to_ptr.hbm [resolvable:$true] %s49
      %s51 = sshll.u32 [#allocation7], 4
      %s52 = int_to_ptr.vmem [resolvable:$true] %s51
      %54 = dma.hbm_to_vmem [thread:$0]  %s50, 128, %s52, [#allocation6]
    $region13: #{tpu_custom_call.1} parent=1 // pred_fallthru
      _
    // Predicated region
    $region14: #{tpu_custom_call.1} parent=1 // pred_check
      _
    $region15: #{tpu_custom_call.1} parent=1 // pred_check_branch
      %56 = sbr.rel (0) target = $region17
    $region16: #{tpu_custom_call.1} parent=1 // pred_region
      %58 = vsyncadd [#allocation9], 0
      %s59 = sshll.u32 %s3, 4
      %s60 = int_to_ptr.hbm [resolvable:$true] %s59
      %s61 = sshll.u32 [#allocation8], 4
      %s62 = int_to_ptr.vmem [resolvable:$true] %s61
      %67 = dma.hbm_to_vmem [thread:$0]  %s60, 1024, %s62, [#allocation9], 128, 128, 8
    $region17: #{tpu_custom_call.1} parent=1 // pred_fallthru
      _
    // Predicated region
    $region18: #{tpu_custom_call.1} parent=1 // pred_check
      _
    $region19: #{tpu_custom_call.1} parent=1 // pred_check_branch
      %69 = sbr.rel (0) target = $region21
    $region20: #{tpu_custom_call.1} parent=1 // pred_region
      _
    $region21: #{tpu_custom_call.1} parent=1 // pred_fallthru
      _
    // Predicated region
    $region22: #{tpu_custom_call.1} parent=1 // pred_check
      _
    $region23: #{tpu_custom_call.1} parent=1 // pred_check_branch
      %71 = sbr.rel (0) target = $region25
    $region24: #{tpu_custom_call.1} parent=1 // pred_region
      %73 = vsyncadd [#allocation9], 0
      %s74 = sshll.u32 %s5, 4
      %s75 = int_to_ptr.hbm [resolvable:$true] %s74
      %s76 = sshll.u32 [#allocation10], 4
      %s77 = int_to_ptr.vmem [resolvable:$true] %s76
      %82 = dma.hbm_to_vmem [thread:$0]  %s75, 4096, %s77, [#allocation9], 512, 512, 32
    $region25: #{tpu_custom_call.1} parent=1 // pred_fallthru
      _
    // Predicated region
    $region26: #{tpu_custom_call.1} parent=1 // pred_check
      _
    $region27: #{tpu_custom_call.1} parent=1 // pred_check_branch
      %84 = sbr.rel (0) target = $region29
    $region28: #{tpu_custom_call.1} parent=1 // pred_region
      _
    $region29: #{tpu_custom_call.1} parent=1 // pred_fallthru
      _
    // Predicated region
    $region30: #{tpu_custom_call.1} parent=1 // pred_check
      _
    $region31: #{tpu_custom_call.1} parent=1 // pred_check_branch
      %86 = sbr.rel (0) target = $region33
    $region32: #{tpu_custom_call.1} parent=1 // pred_region
      %88 = vsyncadd [#allocation12], 0
      %s89 = sshll.u32 %s7, 4
      %s90 = int_to_ptr.hbm [resolvable:$true] %s89
      %s91 = sshll.u32 [#allocation11], 4
      %s92 = int_to_ptr.vmem [resolvable:$true] %s91
      %97 = dma.hbm_to_vmem [thread:$0]  %s90, 2048, %s92, [#allocation12], 128, 128, 8
    $region33: #{tpu_custom_call.1} parent=1 // pred_fallthru
      _
    // Predicated region
    $region34: #{tpu_custom_call.1} parent=1 // pred_check
      _
    $region35: #{tpu_custom_call.1} parent=1 // pred_check_branch
      %99 = sbr.rel (0) target = $region37
    $region36: #{tpu_custom_call.1} parent=1 // pred_region
      %101 = dma.done [#allocation3], 1024
    $region37: #{tpu_custom_call.1} parent=1 // pred_fallthru
      _
    // Predicated region
    $region38: #{tpu_custom_call.1} parent=1 // pred_check
      _
    $region39: #{tpu_custom_call.1} parent=1 // pred_check_branch
      %103 = sbr.rel (0) target = $region41
    $region40: #{tpu_custom_call.1} parent=1 // pred_region
      %105 = dma.done [#allocation6], 2048
    $region41: #{tpu_custom_call.1} parent=1 // pred_fallthru
      _
    // Predicated region
    $region42: #{tpu_custom_call.1} parent=1 // pred_check
      _
    $region43: #{tpu_custom_call.1} parent=1 // pred_check_branch
      %107 = sbr.rel (0) target = $region45
    $region44: #{tpu_custom_call.1} parent=1 // pred_region
      %109 = dma.done [#allocation6], 128
    $region45: #{tpu_custom_call.1} parent=1 // pred_fallthru
      _
    // Predicated region
    $region46: #{tpu_custom_call.1} parent=1 // pred_check
      _
    $region47: #{tpu_custom_call.1} parent=1 // pred_check_branch
      %111 = sbr.rel (0) target = $region49
    $region48: #{tpu_custom_call.1} parent=1 // pred_region
      %113 = dma.done [#allocation9], 1024
    $region49: #{tpu_custom_call.1} parent=1 // pred_fallthru
      _
    // Predicated region
    $region50: #{tpu_custom_call.1} parent=1 // pred_check
      _
    $region51: #{tpu_custom_call.1} parent=1 // pred_check_branch
      %115 = sbr.rel (0) target = $region53
    $region52: #{tpu_custom_call.1} parent=1 // pred_region
      %117 = dma.done [#allocation9], 4096
    $region53: #{tpu_custom_call.1} parent=1 // pred_fallthru
      _
    // Predicated region
    $region54: #{tpu_custom_call.1} parent=1 // pred_check
      _
    $region55: #{tpu_custom_call.1} parent=1 // pred_check_branch
      %119 = sbr.rel (0) target = $region57
    $region56: #{tpu_custom_call.1} parent=1 // pred_region
      %121 = dma.done [#allocation12], 2048
    $region57: #{tpu_custom_call.1} parent=1 // pred_fallthru
      _
    %v122 = vld [vmem:[#allocation2] sm:$0xff]
    %v123 = vld [vmem:[#allocation2 + $0x8] sm:$0xff]
    %v124 = vld [vmem:[#allocation2 + $0x10] sm:$0xff]
    %v125 = vld [vmem:[#allocation2 + $0x18] sm:$0xff]
    %v126 = vld [vmem:[#allocation2 + $0x20] sm:$0xff]
    %v127 = vld [vmem:[#allocation2 + $0x28] sm:$0xff]
    %v128 = vld [vmem:[#allocation2 + $0x30] sm:$0xff]
    %v129 = vld [vmem:[#allocation2 + $0x38] sm:$0xff]
    %v130 = vld [vmem:[#allocation5] sm:$0xff]
    %v131 = vld [vmem:[#allocation5 + $0x8] sm:$0xff]
    %v132 = vld [vmem:[#allocation5 + $0x10] sm:$0xff]
    %v133 = vld [vmem:[#allocation5 + $0x18] sm:$0xff]
    %v134 = vld [vmem:[#allocation5 + $0x20] sm:$0xff]
    %v135 = vld [vmem:[#allocation5 + $0x28] sm:$0xff]
    %v136 = vld [vmem:[#allocation5 + $0x30] sm:$0xff]
    %v137 = vld [vmem:[#allocation5 + $0x38] sm:$0xff]
    %v138 = vld [vmem:[#allocation5 + $0x40] sm:$0xff]
    %v139 = vld [vmem:[#allocation5 + $0x48] sm:$0xff]
    %v140 = vld [vmem:[#allocation5 + $0x50] sm:$0xff]
    %v141 = vld [vmem:[#allocation5 + $0x58] sm:$0xff]
    %v142 = vld [vmem:[#allocation5 + $0x60] sm:$0xff]
    %v143 = vld [vmem:[#allocation5 + $0x68] sm:$0xff]
    %v144 = vld [vmem:[#allocation5 + $0x70] sm:$0xff]
    %v145 = vld [vmem:[#allocation5 + $0x78] sm:$0xff]
    %146 = vmatpush.msra.mxu0 %v145
    %147 = vmatpush.msra.mxu0 %v144
    %148 = vmatpush.msra.mxu0 %v143
    %149 = vmatpush.msra.mxu0 %v142
    %150 = vmatpush.msra.mxu0 %v141
    %151 = vmatpush.msra.mxu0 %v140
    %152 = vmatpush.msra.mxu0 %v139
    %153 = vmatpush.msra.mxu0 %v138
    %154 = vmatpush.msra.mxu0 %v137
    %155 = vmatpush.msra.mxu0 %v136
    %156 = vmatpush.msra.mxu0 %v135
    %157 = vmatpush.msra.mxu0 %v134
    %158 = vmatpush.msra.mxu0 %v133
    %159 = vmatpush.msra.mxu0 %v132
    %160 = vmatpush.msra.mxu0 %v131
    %161 = vmatpush.msra.mxu0 %v130
    %162 = vmatmul.f32.gmra.mxu0 %v122
    %v163 = vpop.f32.mrf.mxu0
    %v164 = vadd.f32 0.0, %v163
    %165 = vmatmul.f32.gmra.mxu0 %v123
    %v166 = vpop.f32.mrf.mxu0
    %v167 = vadd.f32 0.0, %v166
    %168 = vmatmul.f32.gmra.mxu0 %v124
    %v169 = vpop.f32.mrf.mxu0
    %v170 = vadd.f32 0.0, %v169
    %171 = vmatmul.f32.gmra.mxu0 %v125
    %v172 = vpop.f32.mrf.mxu0
    %v173 = vadd.f32 0.0, %v172
    %174 = vmatmul.f32.gmra.mxu0 %v126
    %v175 = vpop.f32.mrf.mxu0
    %v176 = vadd.f32 0.0, %v175
    %177 = vmatmul.f32.gmra.mxu0 %v127
    %v178 = vpop.f32.mrf.mxu0
    %v179 = vadd.f32 0.0, %v178
    %180 = vmatmul.f32.gmra.mxu0 %v128
    %v181 = vpop.f32.mrf.mxu0
    %v182 = vadd.f32 0.0, %v181
    %183 = vmatmul.f32.gmra.mxu0 %v129
    %v184 = vpop.f32.mrf.mxu0
    %v185 = vadd.f32 0.0, %v184
    %186 = vdwg.mxu0
    %v187 = vmax.f32 %v164, 0.0
    %v188 = vmax.f32 %v167, 0.0
    %v189 = vmax.f32 %v170, 0.0
    %v190 = vmax.f32 %v173, 0.0
    %v191 = vmax.f32 %v176, 0.0
    %v192 = vmax.f32 %v179, 0.0
    %v193 = vmax.f32 %v182, 0.0
    %v194 = vmax.f32 %v185, 0.0
    %195 = vadd.xlane.f32.xlu0 %v187
    %v196 = vpop.xlane.xlu0 %195
    %197 = vadd.xlane.f32.xlu0 %v188
    %v198 = vpop.xlane.xlu0 %197
    %199 = vadd.xlane.f32.xlu0 %v189
    %v200 = vpop.xlane.xlu0 %199
    %201 = vadd.xlane.f32.xlu0 %v190
    %v202 = vpop.xlane.xlu0 %201
    %203 = vadd.xlane.f32.xlu0 %v191
    %v204 = vpop.xlane.xlu0 %203
    %205 = vadd.xlane.f32.xlu0 %v192
    %v206 = vpop.xlane.xlu0 %205
    %207 = vadd.xlane.f32.xlu0 %v193
    %v208 = vpop.xlane.xlu0 %207
    %209 = vadd.xlane.f32.xlu0 %v194
    %v210 = vpop.xlane.xlu0 %209
    %v211 = vld [vmem:[#allocation7] sm:$0xff]
    %v212 = vld [vmem:[#allocation8] sm:$0xff]
    %v213 = vld [vmem:[#allocation8 + $0x8] sm:$0xff]
    %v214 = vld [vmem:[#allocation8 + $0x10] sm:$0xff]
    %v215 = vld [vmem:[#allocation8 + $0x18] sm:$0xff]
    %v216 = vld [vmem:[#allocation8 + $0x20] sm:$0xff]
    %v217 = vld [vmem:[#allocation8 + $0x28] sm:$0xff]
    %v218 = vld [vmem:[#allocation8 + $0x30] sm:$0xff]
    %v219 = vld [vmem:[#allocation8 + $0x38] sm:$0xff]
    %v220 = vmul.f32 %v196, %v212
    %v221 = vmul.f32 %v198, %v213
    %v222 = vmul.f32 %v200, %v214
    %v223 = vmul.f32 %v202, %v215
    %v224 = vmul.f32 %v204, %v216
    %v225 = vmul.f32 %v206, %v217
    %v226 = vmul.f32 %v208, %v218
    %v227 = vmul.f32 %v210, %v219
    %v228 = vld [vmem:[%s4] sm:$0x1]
    %v230 = vperm.slane %v228, 0
    %vm232 = vcmask 523264
    %v234 = vsel %vm232, %v211, 0
    %236 = vmatpush.msra.mxu0 0.0
    %237 = vmatpush.msra.mxu0 0.0
    %238 = vmatpush.msra.mxu0 0.0
    %239 = vmatpush.msra.mxu0 0.0
    %240 = vmatpush.msra.mxu0 0.0
    %241 = vmatpush.msra.mxu0 0.0
    %242 = vmatpush.msra.mxu0 0.0
    %243 = vmatpush.msra.mxu0 0.0
    %244 = vmatpush.msra.mxu0 %v227
    %245 = vmatpush.msra.mxu0 %v226
    %246 = vmatpush.msra.mxu0 %v225
    %247 = vmatpush.msra.mxu0 %v224
    %248 = vmatpush.msra.mxu0 %v223
    %249 = vmatpush.msra.mxu0 %v222
    %250 = vmatpush.msra.mxu0 %v221
    %251 = vmatpush.msra.mxu0 %v220
    %252 = vmatmul.f32.gmra.mxu0 %v234
    %v253 = vpop.f32.mrf.mxu0
    %v254 = vadd.f32 %v230, %v253
    %255 = vdwg.mxu0
    %v256 = vmax.f32 %v254, 0.0
    %v257 = vld [vmem:[#allocation10] sm:$0xff]
    %v258 = vld [vmem:[#allocation10 + $0x8] sm:$0xff]
    %v259 = vld [vmem:[#allocation10 + $0x10] sm:$0xff]
    %v260 = vld [vmem:[#allocation10 + $0x18] sm:$0xff]
    %v261 = vld [vmem:[#allocation10 + $0x20] sm:$0xff]
    %v262 = vld [vmem:[#allocation10 + $0x28] sm:$0xff]
    %v263 = vld [vmem:[#allocation10 + $0x30] sm:$0xff]
    %v264 = vld [vmem:[#allocation10 + $0x38] sm:$0xff]
    %v265 = vld [vmem:[#allocation10 + $0x40] sm:$0xff]
    %v266 = vld [vmem:[#allocation10 + $0x48] sm:$0xff]
    %v267 = vld [vmem:[#allocation10 + $0x50] sm:$0xff]
    %v268 = vld [vmem:[#allocation10 + $0x58] sm:$0xff]
    %v269 = vld [vmem:[#allocation10 + $0x60] sm:$0xff]
    %v270 = vld [vmem:[#allocation10 + $0x68] sm:$0xff]
    %v271 = vld [vmem:[#allocation10 + $0x70] sm:$0xff]
    %v272 = vld [vmem:[#allocation10 + $0x78] sm:$0xff]
    %v273 = vld [vmem:[#allocation10 + $0x80] sm:$0xff]
    %v274 = vld [vmem:[#allocation10 + $0x88] sm:$0xff]
    %v275 = vld [vmem:[#allocation10 + $0x90] sm:$0xff]
    %v276 = vld [vmem:[#allocation10 + $0x98] sm:$0xff]
    %v277 = vld [vmem:[#allocation10 + $0xa0] sm:$0xff]
    %v278 = vld [vmem:[#allocation10 + $0xa8] sm:$0xff]
    %v279 = vld [vmem:[#allocation10 + $0xb0] sm:$0xff]
    %v280 = vld [vmem:[#allocation10 + $0xb8] sm:$0xff]
    %v281 = vld [vmem:[#allocation10 + $0xc0] sm:$0xff]
    %v282 = vld [vmem:[#allocation10 + $0xc8] sm:$0xff]
    %v283 = vld [vmem:[#allocation10 + $0xd0] sm:$0xff]
    %v284 = vld [vmem:[#allocation10 + $0xd8] sm:$0xff]
    %v285 = vld [vmem:[#allocation10 + $0xe0] sm:$0xff]
    %v286 = vld [vmem:[#allocation10 + $0xe8] sm:$0xff]
    %v287 = vld [vmem:[#allocation10 + $0xf0] sm:$0xff]
    %v288 = vld [vmem:[#allocation10 + $0xf8] sm:$0xff]
    %v289 = vld [vmem:[%s6] sm:$0xf]
    %v291 = vperm.slane %v289, 0
    %v292 = vperm.slane %v289, 1
    %v293 = vperm.slane %v289, 2
    %v294 = vperm.slane %v289, 3
    %v300 = vsel %vm232, %v256, 0
    %302 = vmatpush.msra.mxu0 0.0
    %303 = vmatpush.msra.mxu0 0.0
    %304 = vmatpush.msra.mxu0 0.0
    %305 = vmatpush.msra.mxu0 0.0
    %306 = vmatpush.msra.mxu0 0.0
    %307 = vmatpush.msra.mxu0 0.0
    %308 = vmatpush.msra.mxu0 0.0
    %309 = vmatpush.msra.mxu0 0.0
    %310 = vmatpush.msra.mxu0 %v285
    %311 = vmatpush.msra.mxu0 %v281
    %312 = vmatpush.msra.mxu0 %v277
    %313 = vmatpush.msra.mxu0 %v273
    %314 = vmatpush.msra.mxu0 %v269
    %315 = vmatpush.msra.mxu0 %v265
    %316 = vmatpush.msra.mxu0 %v261
    %317 = vmatpush.msra.mxu0 %v257
    %318 = vmatmul.f32.gmra.mxu0 %v300
    %v319 = vpop.f32.mrf.mxu0
    %v320 = vadd.f32 %v291, %v319
    %321 = vdwg.mxu0
    %322 = vmatpush.msra.mxu0 0.0
    %323 = vmatpush.msra.mxu0 0.0
    %324 = vmatpush.msra.mxu0 0.0
    %325 = vmatpush.msra.mxu0 0.0
    %326 = vmatpush.msra.mxu0 0.0
    %327 = vmatpush.msra.mxu0 0.0
    %328 = vmatpush.msra.mxu0 0.0
    %329 = vmatpush.msra.mxu0 0.0
    %330 = vmatpush.msra.mxu0 %v286
    %331 = vmatpush.msra.mxu0 %v282
    %332 = vmatpush.msra.mxu0 %v278
    %333 = vmatpush.msra.mxu0 %v274
    %334 = vmatpush.msra.mxu0 %v270
    %335 = vmatpush.msra.mxu0 %v266
    %336 = vmatpush.msra.mxu0 %v262
    %337 = vmatpush.msra.mxu0 %v258
    %338 = vmatmul.f32.gmra.mxu0 %v300
    %v339 = vpop.f32.mrf.mxu0
    %v340 = vadd.f32 %v292, %v339
    %341 = vdwg.mxu0
    %342 = vmatpush.msra.mxu0 0.0
    %343 = vmatpush.msra.mxu0 0.0
    %344 = vmatpush.msra.mxu0 0.0
    %345 = vmatpush.msra.mxu0 0.0
    %346 = vmatpush.msra.mxu0 0.0
    %347 = vmatpush.msra.mxu0 0.0
    %348 = vmatpush.msra.mxu0 0.0
    %349 = vmatpush.msra.mxu0 0.0
    %350 = vmatpush.msra.mxu0 %v287
    %351 = vmatpush.msra.mxu0 %v283
    %352 = vmatpush.msra.mxu0 %v279
    %353 = vmatpush.msra.mxu0 %v275
    %354 = vmatpush.msra.mxu0 %v271
    %355 = vmatpush.msra.mxu0 %v267
    %356 = vmatpush.msra.mxu0 %v263
    %357 = vmatpush.msra.mxu0 %v259
    %358 = vmatmul.f32.gmra.mxu0 %v300
    %v359 = vpop.f32.mrf.mxu0
    %v360 = vadd.f32 %v293, %v359
    %361 = vdwg.mxu0
    %362 = vmatpush.msra.mxu0 0.0
    %363 = vmatpush.msra.mxu0 0.0
    %364 = vmatpush.msra.mxu0 0.0
    %365 = vmatpush.msra.mxu0 0.0
    %366 = vmatpush.msra.mxu0 0.0
    %367 = vmatpush.msra.mxu0 0.0
    %368 = vmatpush.msra.mxu0 0.0
    %369 = vmatpush.msra.mxu0 0.0
    %370 = vmatpush.msra.mxu0 %v288
    %371 = vmatpush.msra.mxu0 %v284
    %372 = vmatpush.msra.mxu0 %v280
    %373 = vmatpush.msra.mxu0 %v276
    %374 = vmatpush.msra.mxu0 %v272
    %375 = vmatpush.msra.mxu0 %v268
    %376 = vmatpush.msra.mxu0 %v264
    %377 = vmatpush.msra.mxu0 %v260
    %378 = vmatmul.f32.gmra.mxu0 %v300
    %v379 = vpop.f32.mrf.mxu0
    %v380 = vadd.f32 %v294, %v379
    %381 = vdwg.mxu0
    %382 = vmatpush.xpose.msra.mxu0 0.0
    %383 = vmatpush.xpose.msra.mxu0 0.0
    %384 = vmatpush.xpose.msra.mxu0 0.0
    %385 = vmatpush.xpose.msra.mxu0 0.0
    %386 = vmatpush.xpose.msra.mxu0 0.0
    %387 = vmatpush.xpose.msra.mxu0 0.0
    %388 = vmatpush.xpose.msra.mxu0 0.0
    %389 = vmatpush.xpose.msra.mxu0 0.0
    %390 = vmatpush.xpose.msra.mxu0 0.0
    %391 = vmatpush.xpose.msra.mxu0 0.0
    %392 = vmatpush.xpose.msra.mxu0 0.0
    %393 = vmatpush.xpose.msra.mxu0 0.0
    %394 = vmatpush.xpose.msra.mxu0 0.0
    %395 = vmatpush.xpose.msra.mxu0 0.0
    %396 = vmatpush.xpose.msra.mxu0 0.0
    %397 = vmatpush.xpose.msra.mxu0 %v320
    %398 = vmatmul.f32.gmra.mxu0 %v360
    %v399 = vpop.f32.mrf.mxu0
    %v400 = vadd.f32 0.0, %v399
    %401 = vdwg.mxu0
    %vm402 = vcmask 64512
    %v403 = vsel %vm402, %v400, -inf
    %404 = vmax.xlane.f32.xlu0 %v403
    %v405 = vpop.xlane.xlu0 %404
    %v406 = vsub.f32 %v400, %v405
    %v407 = vmul.f32 %v406, 1.442695
    %v408 = vpow.pop %v407
    %v409 = vsel %vm402, %v408, 0.0
    %410 = vadd.xlane.f32.xlu0 %v409
    %v411 = vpop.xlane.xlu0 %410
    %v412 = vrcp.pop %v411
    %v413 = vmul.f32 %v408, %v412
    %v415 = vsel %vm402, %v413, 0
    %417 = vmatpush.msra.mxu0 0.0
    %418 = vmatpush.msra.mxu0 0.0
    %419 = vmatpush.msra.mxu0 0.0
    %420 = vmatpush.msra.mxu0 0.0
    %421 = vmatpush.msra.mxu0 0.0
    %422 = vmatpush.msra.mxu0 0.0
    %423 = vmatpush.msra.mxu0 0.0
    %424 = vmatpush.msra.mxu0 0.0
    %425 = vmatpush.msra.mxu0 0.0
    %426 = vmatpush.msra.mxu0 0.0
    %427 = vmatpush.msra.mxu0 0.0
    %428 = vmatpush.msra.mxu0 0.0
    %429 = vmatpush.msra.mxu0 0.0
    %430 = vmatpush.msra.mxu0 0.0
    %431 = vmatpush.msra.mxu0 0.0
    %432 = vmatpush.msra.mxu0 %v340
    %433 = vmatmul.f32.gmra.mxu0 %v415
    %v434 = vpop.f32.mrf.mxu0
    %v435 = vadd.f32 0.0, %v434
    %436 = vdwg.mxu0
    %v437 = vsub.f32 0.0, %v435
    %v438 = vmul.f32 %v437, 1.442695
    %v439 = vpow.pop %v438
    %v440 = vadd.f32 %v439, 1.0
    %v441 = vrcp.pop %v440
    %v442 = vld [vmem:[#allocation11] sm:$0xff]
    %v443 = vld [vmem:[#allocation11 + $0x8] sm:$0xff]
    %v444 = vld [vmem:[#allocation11 + $0x10] sm:$0xff]
    %v445 = vld [vmem:[#allocation11 + $0x18] sm:$0xff]
    %v446 = vld [vmem:[#allocation11 + $0x20] sm:$0xff]
    %v447 = vld [vmem:[#allocation11 + $0x28] sm:$0xff]
    %v448 = vld [vmem:[#allocation11 + $0x30] sm:$0xff]
    %v449 = vld [vmem:[#allocation11 + $0x38] sm:$0xff]
    %v450 = vld [vmem:[#allocation11 + $0x40] sm:$0xff]
    %v451 = vld [vmem:[#allocation11 + $0x48] sm:$0xff]
    %v452 = vld [vmem:[#allocation11 + $0x50] sm:$0xff]
    %v453 = vld [vmem:[#allocation11 + $0x58] sm:$0xff]
    %v454 = vld [vmem:[#allocation11 + $0x60] sm:$0xff]
    %v455 = vld [vmem:[#allocation11 + $0x68] sm:$0xff]
    %v456 = vld [vmem:[#allocation11 + $0x70] sm:$0xff]
    %v457 = vld [vmem:[#allocation11 + $0x78] sm:$0xff]
    %458 = vmatpush.msra.mxu0 %v457
    %459 = vmatpush.msra.mxu0 %v456
    %460 = vmatpush.msra.mxu0 %v455
    %461 = vmatpush.msra.mxu0 %v454
    %462 = vmatpush.msra.mxu0 %v453
    %463 = vmatpush.msra.mxu0 %v452
    %464 = vmatpush.msra.mxu0 %v451
    %465 = vmatpush.msra.mxu0 %v450
    %466 = vmatpush.msra.mxu0 %v449
    %467 = vmatpush.msra.mxu0 %v448
    %468 = vmatpush.msra.mxu0 %v447
    %469 = vmatpush.msra.mxu0 %v446
    %470 = vmatpush.msra.mxu0 %v445
    %471 = vmatpush.msra.mxu0 %v444
    %472 = vmatpush.msra.mxu0 %v443
    %473 = vmatpush.msra.mxu0 %v442
    %474 = vmatmul.f32.gmra.mxu0 %v441
    %v475 = vpop.f32.mrf.mxu0
    %v476 = vadd.f32 0.0, %v475
    %477 = vdwg.mxu0
    %v478 = vadd.f32 %v380, %v476
    %479 = vmax.xlane.f32.xlu0 %v478
    %v480 = vpop.xlane.xlu0 %479
    %v481 = vsub.f32 %v478, %v480
    %v482 = vmul.f32 %v481, 1.442695
    %v483 = vpow.pop %v482
    %484 = vadd.xlane.f32.xlu0 %v483
    %v485 = vpop.xlane.xlu0 %484
    %v486 = vrcp.pop %v485
    %v487 = vmul.f32 %v485, %v486
    %v488 = vsub.f32 1.0, %v487
    %v489 = vmul.f32 %v486, %v488
    %v490 = vadd.f32 %v486, %v489
    %vm491 = vweird.f32 %v485
    %vm492 = vweird.f32 %v486
    %vm493 = vmor %vm491, %vm492
    %v494 = vsel %vm493, %v486, %v490
    %v495 = vand.u32 2147483647, %v485
    %vm496 = vcmp.eq.f32.partialorder %v495, 8.507059e+37
    %v497 = vand.u32 %v485, 2147483648
    %v498 = vor.u32 1.1754944e-38, %v497
    %v499 = vsel %vm496, %v498, %v494
    %v500 = vmul.f32 %v483, %v499
    %501 = vst [vmem:[#allocation13] sm:$0xff] %v500
    // Predicated region
    $region58: #{tpu_custom_call.1} parent=1 // pred_check
      _
    $region59: #{tpu_custom_call.1} parent=1 // pred_check_branch
      %503 = sbr.rel (0) target = $region61
    $region60: #{tpu_custom_call.1} parent=1 // pred_region
      %505 = vsyncadd [#allocation4], 0
      %s507 = sshll.u32 [#allocation13], 4
      %s508 = int_to_ptr.vmem [resolvable:$true] %s507
      %s509 = sshll.u32 %s8, 4
      %s510 = int_to_ptr.hbm [resolvable:$true] %s509
      %512 = dma.vmem_to_hbm [thread:$0]  %s508, 128, %s510, [#allocation4]
    $region61: #{tpu_custom_call.1} parent=1 // pred_fallthru
      _
    // Predicated region
    $region62: #{tpu_custom_call.1} parent=1 // pred_check
      _
    $region63: #{tpu_custom_call.1} parent=1 // pred_check_branch
      %514 = sbr.rel (0) target = $region65
    $region64: #{tpu_custom_call.1} parent=1 // pred_region
      %516 = dma.done [#allocation4], 128
    $region65: #{tpu_custom_call.1} parent=1 // pred_fallthru
      _
    %517 = vsyncpa [#allocation3], 1
    %518 = vsyncpa [#allocation6], 1
    %519 = vsyncpa [#allocation9], 1
    %520 = vsyncpa [#allocation12], 1
    %521 = vsyncpa [#allocation4], 1

</llo_original>
